<compile_context>
chip_gen: v5e
topology: v5e:2x2
jax: 0.10.0
libtpu: 0.0.40
codegen_flags: <defaults>
</compile_context>

<pallas_src>
import math

import jax
import jax.numpy as jnp
from jax.experimental import pallas as pl
from jax.experimental.pallas import tpu as pltpu

_LANE = 128
# ~4 MiB per x/out block; with x(2) + out(2) + pe(2 / B_TILE) double-buffered the
# working set stays <= ~24 MiB, under the explicit 48 MiB limit below.
_TARGET_BLOCK_BYTES = 4 * 1024 * 1024
_VMEM_LIMIT_BYTES = 48 * 1024 * 1024   # >= v5e's 16 MiB default, <= v7x's 64 MiB/TC
_MAX_BATCH_TILE = 8


def make_pe_table(d_model: int, max_len: int = 5000, dtype=jnp.float32) -> jnp.ndarray:
    """(max_len, d_model) sin/cos table, as in PositionalEncoding.__init__.

    Built once at init directly in the compute dtype (avoids a per-forward cast
    pass).  Robust to odd d_model (cos gets floor(d/2) columns; the PyTorch
    original would raise there).
    """
    position = jnp.arange(max_len, dtype=jnp.float32)[:, None]               # (max_len, 1)
    div_term = jnp.exp(
        jnp.arange(0, d_model, 2, dtype=jnp.float32) * (-math.log(10000.0) / d_model)
    )                                                                         # (ceil(d/2),)
    angles = position * div_term                                              # (max_len, ceil(d/2))
    pe = jnp.zeros((max_len, d_model), dtype=jnp.float32)
    pe = pe.at[:, 0::2].set(jnp.sin(angles))
    pe = pe.at[:, 1::2].set(jnp.cos(angles[:, : d_model // 2]))
    return pe.astype(dtype)


def _add_pe_kernel(x_ref, pe_ref, o_ref):
    # x_ref/o_ref: (B_TILE, tile_rows, C); pe_ref: (1, tile_rows, C) -> broadcast over batch.
    o_ref[...] = x_ref[...] + pe_ref[...]


def _sublane_multiple(dtype) -> int:
    # Sub-32-bit dtypes pack along sublanes: 8 rows (f32), 16 (bf16), 32 (int8/fp8).
    return max(8, 32 // jnp.dtype(dtype).itemsize)


def _pick_batch_tile(B: int) -> int:
    # Fold batch into the block to amortize per-grid-step overhead.  For B <= 8 fold
    # all of B (inner grid axis dropped); otherwise the largest divisor <= 8 so no
    # partial batch blocks are needed.
    if B <= _MAX_BATCH_TILE:
        return B
    for bt in range(_MAX_BATCH_TILE, 0, -1):
        if B % bt == 0:
            return bt
    return 1


def _pick_tile_rows(total_rows: int, b_tile: int, lane_padded_cols: int, dtype) -> int:
    # Size the x/out block to ~_TARGET_BLOCK_BYTES using the *lane-padded* row width
    # (VMEM pads the last dim to a multiple of 128), rounded to a sublane multiple.
    dsize = jnp.dtype(dtype).itemsize
    sub = _sublane_multiple(dtype)
    tr = _TARGET_BLOCK_BYTES // (b_tile * lane_padded_cols * dsize)
    tr = max(sub, (tr // sub) * sub)
    if total_rows <= tr:
        tr = total_rows  # full-extent block: always layout-legal
    return tr


def _pallas_broadcast_add(x3, pe3, b_tile, tile_rows, cost, donate_x):
    """x3: (B, R, C); pe3: (1, R, C).  out = x3 + pe3 (broadcast over batch).

    Grid = (row_tiles[, batch_tiles]) with batch innermost, so the pe block index
    is constant across consecutive steps and Pallas does not re-fetch pe per batch
    tile (pe HBM traffic stays L*D, not B*L*D).
    """
    B, R, C = x3.shape
    row_tiles = pl.cdiv(R, tile_rows)
    b_tiles = pl.cdiv(B, b_tile)

    if b_tiles == 1:
        grid = (row_tiles,)
        x_map = lambda r: (0, r, 0)
        pe_map = lambda r: (0, r, 0)
    else:
        grid = (row_tiles, b_tiles)
        x_map = lambda r, b: (b, r, 0)
        pe_map = lambda r, b: (0, r, 0)

    kwargs = {}
    if donate_x:
        # No HBM-bandwidth change, but halves the HBM footprint / drops an output
        # allocation when the caller no longer needs x.
        kwargs["input_output_aliases"] = {0: 0}

    return pl.pallas_call(
        _add_pe_kernel,
        out_shape=jax.ShapeDtypeStruct((B, R, C), x3.dtype),
        grid_spec=pltpu.PrefetchScalarGridSpec(
            num_scalar_prefetch=0,
            grid=grid,
            in_specs=[
                pl.BlockSpec((b_tile, tile_rows, C), x_map),   # x tile
                # pe tile, reused across the inner batch axis.  (Single-buffering it
                # via pipeline_mode would reclaim one small tile of VMEM; its default
                # double buffer is already accounted for in the sizing above.)
                pl.BlockSpec((1, tile_rows, C), pe_map),
            ],
            out_specs=pl.BlockSpec((b_tile, tile_rows, C), x_map),
        ),
        compiler_params=pltpu.CompilerParams(
            dimension_semantics=("parallel",) * len(grid),   # megacore-shardable on v7x
            vmem_limit_bytes=_VMEM_LIMIT_BYTES,
        ),
        cost_estimate=cost,
        **kwargs,
    )(x3, pe3)


def positional_encoding(x: jnp.ndarray, pe_table: jnp.ndarray, *, donate_x: bool = False):
    """PositionalEncoding.forward: x + pe[:L] broadcast over batch.

    x:        (B, L, D)
    pe_table: (max_len, D); ideally precomputed in x.dtype via make_pe_table(..., dtype=...)
    """
    B, L, D = x.shape
    dsize = jnp.dtype(x.dtype).itemsize

    pe = pe_table[:L, :]
    if pe.dtype != x.dtype:
        # Prefer building the table in the compute dtype at init; this cast is only a
        # fallback so mixed-dtype calls still work.
        pe = pe.astype(x.dtype)

    cost = pl.CostEstimate(
        flops=B * L * D,
        transcendentals=0,
        bytes_accessed=(2 * B * L * D + L * D) * dsize,
    )

    b_tile = _pick_batch_tile(B)
    n = L * D
    if n % _LANE == 0:
        # Lane-dense fast path: flatten (L, D) -> (rows, 128) so loads/stores are
        # full-lane even when D < 128.  The reshapes are free (contiguous).
        rows = n // _LANE
        tr = _pick_tile_rows(rows, b_tile, _LANE, x.dtype)
        out = _pallas_broadcast_add(
            x.reshape(B, rows, _LANE), pe.reshape(1, rows, _LANE),
            b_tile, tr, cost, donate_x)
        return out.reshape(B, L, D)

    # Fallback (L*D not a multiple of 128): tile the sequence axis, keep D as lanes.
    # Tile sizing uses the lane-padded width ceil(D/128)*128 so the VMEM working set
    # matches the fast path even for narrow / odd D (fixes the oversubscription risk).
    # TODO(synk): for large L with narrow D, route floor(L*D/128)*128 elements through
    # the lane-dense path and handle the small tail separately; skipped because the
    # required wrapper-side slice adds a full extra HBM pass over x.
    lane_padded = pl.cdiv(D, _LANE) * _LANE
    tl = _pick_tile_rows(L, b_tile, lane_padded, x.dtype)
    return _pallas_broadcast_add(x, pe[None, :, :], b_tile, tl, cost, donate_x)


if __name__ == "__main__":
    key = jax.random.PRNGKey(0)
    k0, k1, k2 = jax.random.split(key, 3)
    max_len = 64  # forward only uses pe[:L]

    # Primary small test: (batch=2, seq=8, d_model=32) -> lane-dense fast path.
    B, L, D = 2, 8, 32
    x = jax.random.normal(k0, (B, L, D), dtype=jnp.float32)
    pe_table = make_pe_table(D, max_len, dtype=x.dtype)
    out = jax.block_until_ready(positional_encoding(x, pe_table))
    ref = x + pe_table[:L, :][None, :, :]
    assert out.shape == (B, L, D)
    assert jnp.allclose(out, ref, atol=1e-6), "mismatch vs reference (fast path)"

    # Batch-tiled grid path: B > 8 exercises the (row_tiles, batch_tiles) grid.
    B1, L1, D1 = 16, 16, 32
    x1 = jax.random.normal(k1, (B1, L1, D1), dtype=jnp.float32)
    pe_table1 = make_pe_table(D1, max_len, dtype=x1.dtype)
    out1 = jax.block_until_ready(positional_encoding(x1, pe_table1))
    ref1 = x1 + pe_table1[:L1, :][None, :, :]
    assert jnp.allclose(out1, ref1, atol=1e-6), "mismatch vs reference (batch-tiled path)"

    # Fallback path: odd d_model, L*D not a multiple of 128.
    B2, L2, D2 = 2, 8, 33
    x2 = jax.random.normal(k2, (B2, L2, D2), dtype=jnp.float32)
    pe_table2 = make_pe_table(D2, max_len, dtype=x2.dtype)
    out2 = jax.block_until_ready(positional_encoding(x2, pe_table2))
    ref2 = x2 + pe_table2[:L2, :][None, :, :]
    assert jnp.allclose(out2, ref2, atol=1e-6), "mismatch vs reference (fallback path)"

    print("KERNEL_OK")
</pallas_src>

<mosaic_0001>
module attributes {stable_mosaic.version = 11 : i64} {
  func.func @_add_pe_kernel(%arg0: i32, %arg1: memref<2x2x128xf32, #tpu.memory_space<vmem>>, %arg2: memref<1x2x128xf32, #tpu.memory_space<vmem>>, %arg3: memref<2x2x128xf32, #tpu.memory_space<vmem>>) attributes {dimension_semantics = [#tpu.dimension_semantics<parallel>], iteration_bounds = array<i64: 1>, scalar_prefetch = 0 : i64, scratch_operands = 0 : i64, tpu.core_type = #tpu.core_type<tc>, window_params = [{transform_indices = @transform_0, window_bounds = array<i64: 2, 2, 128>}, {transform_indices = @transform_1, window_bounds = array<i64: 1, 2, 128>}, {transform_indices = @transform_2, window_bounds = array<i64: 2, 2, 128>}]} {
    %c0 = arith.constant 0 : index
    %c0_0 = arith.constant 0 : index
    %c0_1 = arith.constant 0 : index
    %0 = vector.load %arg1[%c0, %c0_0, %c0_1] : memref<2x2x128xf32, #tpu.memory_space<vmem>>, vector<2x2x128xf32>
    %c0_2 = arith.constant 0 : index
    %c0_3 = arith.constant 0 : index
    %c0_4 = arith.constant 0 : index
    %1 = vector.load %arg2[%c0_2, %c0_3, %c0_4] : memref<1x2x128xf32, #tpu.memory_space<vmem>>, vector<1x2x128xf32>
    %2 = vector.broadcast %1 : vector<1x2x128xf32> to vector<2x2x128xf32>
    %3 = arith.addf %0, %2 : vector<2x2x128xf32>
    %c0_5 = arith.constant 0 : index
    %c0_6 = arith.constant 0 : index
    %c0_7 = arith.constant 0 : index
    %4 = vector.load %arg3[%c0_5, %c0_6, %c0_7] : memref<2x2x128xf32, #tpu.memory_space<vmem>>, vector<2x2x128xf32>
    tpu.vector_store %arg3[%c0_5, %c0_6, %c0_7], %3 {strides = array<i32>} : memref<2x2x128xf32, #tpu.memory_space<vmem>>, vector<2x2x128xf32>,
    return
  }
  func.func @transform_0(%arg0: i32) -> (i32, i32, i32) {
    %c0_i32 = arith.constant 0 : i32
    %c0_i32_0 = arith.constant 0 : i32
    %c0_i32_1 = arith.constant 0 : i32
    return %c0_i32, %arg0, %c0_i32_0 : i32, i32, i32
  }
  func.func @transform_1(%arg0: i32) -> (i32, i32, i32) {
    %c0_i32 = arith.constant 0 : i32
    %c0_i32_0 = arith.constant 0 : i32
    %c0_i32_1 = arith.constant 0 : i32
    return %c0_i32, %arg0, %c0_i32_0 : i32, i32, i32
  }
  func.func @transform_2(%arg0: i32) -> (i32, i32, i32) {
    %c0_i32 = arith.constant 0 : i32
    %c0_i32_0 = arith.constant 0 : i32
    %c0_i32_1 = arith.constant 0 : i32
    return %c0_i32, %arg0, %c0_i32_0 : i32, i32, i32
  }
}

</mosaic_0001>

<llo_original>
// kernel: tpu_custom_call.1
$region0: #{tpu_custom_call.1}
  #allocation0 [shape = 'u32[]', space=smem, size = 0x4, offset = 0x4, fixed_abs, tag = 'smem constant byte address 0x4 - core index']
  #allocation1 [shape = 'u32[72,128]{1,0:T(1,128)}', space=vmem, size = 0x9000, scoped, tag = 'internal scratch']
  %s0 = inlined_call_operand.hbm [shape: f32[2,2,128], index: 0, kind: input, shape index: {}]
  %s1 = inlined_call_operand.hbm [shape: f32[1,2,128], index: 1, kind: input, shape index: {}]
  %s2 = inlined_call_operand.hbm [shape: f32[2,2,128], index: 2, kind: output, shape index: {}]
  %s3 = sld [smem:[#allocation0]]
  $region26: #{tpu_custom_call.1} parent=0
    _
  %s5 = ssub.s32 1, %s3
  %s6 = scalar_select 0, %s5, %s3
  $region1: #{tpu_custom_call.1} parent=0
    #allocation2 [shape = 'u8[2048]{0}', space=vmem, size = 0x800, scoped, tag = 'input window, operand 0, single buffered']
    #allocation3 [shape = 's32[1]{0}', space=sflag, size = 0x4, scoped, tag = 'scoped memory for tpu_custom_call.1']
    #allocation4 [shape = 's32[1]{0}', space=sflag, size = 0x4, scoped, tag = 'scoped memory for tpu_custom_call.1']
    #allocation5 [shape = 'u8[1024]{0}', space=vmem, size = 0x400, scoped, tag = 'input window, operand 1, single buffered']
    #allocation6 [shape = 's32[1]{0}', space=sflag, size = 0x4, scoped, tag = 'scoped memory for tpu_custom_call.1']
    #allocation7 [shape = 'u8[2048]{0}', space=vmem, size = 0x800, scoped, tag = 'output window, operand 0, single buffered']
    %7 = vsyncpa [#allocation3], 0
    %8 = vsyncpa [#allocation6], 0
    %9 = vsyncpa [#allocation4], 0
    // Predicated region
    $region2: #{tpu_custom_call.1} parent=1 // pred_check
      _
    $region3: #{tpu_custom_call.1} parent=1 // pred_check_branch
      %11 = sbr.rel (0) target = $region5
    $region4: #{tpu_custom_call.1} parent=1 // pred_region
      %13 = vsyncadd [#allocation3], 0
      %s14 = sshll.u32 %s0, 4
      %s15 = int_to_ptr.hbm [resolvable:$true] %s14
      %s16 = sshll.u32 [#allocation2], 4
      %s17 = int_to_ptr.vmem [resolvable:$true] %s16
      %22 = dma.hbm_to_vmem [thread:$0]  %s15, 64, %s17, [#allocation3], 32, 32, 2
    $region5: #{tpu_custom_call.1} parent=1 // pred_fallthru
      _
    // Predicated region
    $region6: #{tpu_custom_call.1} parent=1 // pred_check
      _
    $region7: #{tpu_custom_call.1} parent=1 // pred_check_branch
      %24 = sbr.rel (0) target = $region9
    $region8: #{tpu_custom_call.1} parent=1 // pred_region
      %26 = vsyncadd [#allocation6], 0
      %s28 = sshll.u32 %s1, 4
      %s29 = int_to_ptr.hbm [resolvable:$true] %s28
      %s30 = sshll.u32 [#allocation5], 4
      %s31 = int_to_ptr.vmem [resolvable:$true] %s30
      %33 = dma.hbm_to_vmem [thread:$0]  %s29, 32, %s31, [#allocation6]
    $region9: #{tpu_custom_call.1} parent=1 // pred_fallthru
      _
    // Predicated region
    $region10: #{tpu_custom_call.1} parent=1 // pred_check
      _
    $region11: #{tpu_custom_call.1} parent=1 // pred_check_branch
      %35 = sbr.rel (0) target = $region13
    $region12: #{tpu_custom_call.1} parent=1 // pred_region
      %37 = dma.done [#allocation3], 64
    $region13: #{tpu_custom_call.1} parent=1 // pred_fallthru
      _
    // Predicated region
    $region14: #{tpu_custom_call.1} parent=1 // pred_check
      _
    $region15: #{tpu_custom_call.1} parent=1 // pred_check_branch
      %39 = sbr.rel (0) target = $region17
    $region16: #{tpu_custom_call.1} parent=1 // pred_region
      %41 = dma.done [#allocation6], 32
    $region17: #{tpu_custom_call.1} parent=1 // pred_fallthru
      _
    %v42 = vld [vmem:[#allocation2] sm:$0x3]
    %v43 = vld [vmem:[#allocation2 + $0x2] sm:$0x3]
    %v44 = vld [vmem:[#allocation5] sm:$0x3]
    %v45 = vadd.f32 %v42, %v44
    %v46 = vadd.f32 %v43, %v44
    %47 = vst [vmem:[#allocation7] sm:$0x3] %v45
    %48 = vst [vmem:[#allocation7 + $0x2] sm:$0x3] %v46
    // Predicated region
    $region18: #{tpu_custom_call.1} parent=1 // pred_check
      _
    $region19: #{tpu_custom_call.1} parent=1 // pred_check_branch
      %50 = sbr.rel (0) target = $region21
    $region20: #{tpu_custom_call.1} parent=1 // pred_region
      %52 = vsyncadd [#allocation4], 0
      %s53 = sshll.u32 [#allocation7], 4
      %s54 = int_to_ptr.vmem [resolvable:$true] %s53
      %s55 = sshll.u32 %s2, 4
      %s56 = int_to_ptr.hbm [resolvable:$true] %s55
      %61 = dma.vmem_to_hbm [thread:$0]  %s54, 64, %s56, [#allocation4], 32, 32, 2
    $region21: #{tpu_custom_call.1} parent=1 // pred_fallthru
      _
    // Predicated region
    $region22: #{tpu_custom_call.1} parent=1 // pred_check
      _
    $region23: #{tpu_custom_call.1} parent=1 // pred_check_branch
      %63 = sbr.rel (0) target = $region25
    $region24: #{tpu_custom_call.1} parent=1 // pred_region
      %65 = dma.done [#allocation4], 64
    $region25: #{tpu_custom_call.1} parent=1 // pred_fallthru
      _
    %66 = vsyncpa [#allocation3], 1
    %67 = vsyncpa [#allocation6], 1
    %68 = vsyncpa [#allocation4], 1

</llo_original>
